<compile_context>
chip_gen: v7x
topology: tpu7x:2x2x1
jax: 0.10.0
libtpu: 0.0.40
codegen_flags: <defaults>
</compile_context>

<pallas_src>
import functools

import jax
import jax.numpy as jnp
from jax.experimental import pallas as pl
from jax.experimental.pallas import tpu as pltpu


def _gaussian_unit_sample_kernel(x_ref, w_ref, b_ref, eps_ref,
                                 z_ref, mu_ref, lv_ref, *, f_out):
    # Fused heads: y = x @ [w_mu | w_lv] + [b_mu | b_lv]   -> [tb, 2*f_out]
    y = jnp.dot(x_ref[...], w_ref[...],
                preferred_element_type=jnp.float32) + b_ref[...]

    mu = y[:, :f_out]        # lanes [0, f_out)
    lv_raw = y[:, f_out:]    # lanes [f_out, 2*f_out)

    # Numerically stable softplus, only on the log_var half (half the EUP work
    # compared with applying it over the fused 2*f_out-lane slab).
    log_var = jnp.maximum(lv_raw, 0.0) + jnp.log1p(jnp.exp(-jnp.abs(lv_raw)))

    # Unit-variance reparameterization: z = mu + eps, eps ~ N(0, 1).
    z = mu + eps_ref[...].astype(jnp.float32)

    z_ref[...] = z.astype(z_ref.dtype)
    mu_ref[...] = mu.astype(mu_ref.dtype)
    lv_ref[...] = log_var.astype(lv_ref.dtype)


def gaussian_unit_sample(x, w_mu, b_mu, w_lv, b_lv, key, *,
                         tb=None, matmul_dtype=jnp.bfloat16, out_dtype=None):
    """Returns (z, mu, log_var) for the GaussianUnitSample module.

    x:            [B, F_in]
    w_mu, w_lv:   [F_in, F_out]   (transposed vs. nn.Linear's [out, in])
    b_mu, b_lv:   [1, F_out]
    key:          jax.random key used to draw eps ~ N(0, 1) (reproducible)
    matmul_dtype: dtype fed to the MXU (default bf16; accumulation stays f32)
    out_dtype:    output dtype (default: x.dtype; pass bf16 to halve writeback)
    """
    B, F_in = x.shape
    F_out = w_mu.shape[1]
    two_f = 2 * F_out
    if out_dtype is None:
        out_dtype = x.dtype
    out_item = jnp.dtype(out_dtype).itemsize

    # eps ~ N(0, 1): keyed, reproducible, matches torch.randn semantics.
    # TODO(synk): on TPU-only deployments this HBM stream could be removed with
    # pltpu.prng_seed + pltpu.stateful_normal, but that does not lower in
    # interpret mode and loses keyed reproducibility.
    eps = jax.random.normal(key, (B, F_out), dtype=jnp.float32)

    # Fuse the two heads -> one [F_in, 2*F_out] RHS (full 128-lane tile when
    # F_out == 64) and one [1, 2*F_out] bias row.
    w = jnp.concatenate([w_mu, w_lv], axis=1)
    b = jnp.concatenate([b_mu, b_lv], axis=1).astype(jnp.float32)
    x_mm = x
    if matmul_dtype is not None:
        x_mm = x.astype(matmul_dtype)
        w = w.astype(matmul_dtype)
    x_item = jnp.dtype(x_mm.dtype).itemsize
    w_item = jnp.dtype(w.dtype).itemsize

    # --- Tile-size selection -------------------------------------------------
    if tb is None:
        if B >= 256:
            # Large batch: big tiles for HBM efficiency, but guarantee >= 2
            # grid steps so ("parallel",) can shard across v7x's 2 TensorCores.
            target = min(512, B // 2)
            cands = [d for d in range(8, target + 1, 8) if B % d == 0]
            tb = max(cands) if cands else B
        else:
            # Small batch: single grid step; per-step overhead dominates and the
            # kernel is launch-bound anyway.
            tb = B
    assert B % tb == 0, f"batch {B} must be divisible by tile {tb}"

    def vmem_working_set(tb_):
        # Double-buffered pipeline working set.  The constant weight/bias blocks
        # are counted double-buffered too (conservative); their index map is
        # grid-invariant so they are only DMA'd once.
        return (2 * tb_ * F_in * x_item              # x tile
                + 2 * F_in * two_f * w_item          # fused weight block
                + 2 * two_f * 4                      # bias row
                + 2 * tb_ * F_out * 4                # eps tile (f32)
                + 2 * 3 * tb_ * F_out * out_item)    # z / mu / log_var tiles

    VMEM_BUDGET = 24 * 1024 * 1024
    while (vmem_working_set(tb) > VMEM_BUDGET and tb % 16 == 0
           and B % (tb // 2) == 0):
        tb //= 2
    # Never below any generation's default scoped limit, never above v7x physical.
    vmem_limit = int(min(max(2 * vmem_working_set(tb), 32 << 20), 64 << 20))

    grid = (B // tb,)
    x_spec = pl.BlockSpec((tb, F_in), lambda i: (i, 0))
    # Constant blocks (grid-invariant index map -> fetched once).  For very
    # large F_in on v7x, pipeline_mode=pl.Buffered(1) would also drop the
    # second weight buffer from VMEM.
    w_spec = pl.BlockSpec((F_in, two_f), lambda i: (0, 0))
    b_spec = pl.BlockSpec((1, two_f), lambda i: (0, 0))
    eps_spec = pl.BlockSpec((tb, F_out), lambda i: (i, 0))
    out_spec = pl.BlockSpec((tb, F_out), lambda i: (i, 0))

    cost = pl.CostEstimate(
        flops=2 * B * F_in * two_f + 4 * B * F_out,
        transcendentals=2 * B * F_out,                       # exp + log1p
        bytes_accessed=(B * F_in * x_item + F_in * two_f * w_item
                        + two_f * 4 + B * F_out * 4
                        + 3 * B * F_out * out_item),
    )

    z, mu, log_var = pl.pallas_call(
        functools.partial(_gaussian_unit_sample_kernel, f_out=F_out),
        out_shape=(
            jax.ShapeDtypeStruct((B, F_out), out_dtype),   # z
            jax.ShapeDtypeStruct((B, F_out), out_dtype),   # mu
            jax.ShapeDtypeStruct((B, F_out), out_dtype),   # log_var
        ),
        grid_spec=pltpu.PrefetchScalarGridSpec(
            num_scalar_prefetch=0,
            grid=grid,
            in_specs=[x_spec, w_spec, b_spec, eps_spec],
            out_specs=[out_spec, out_spec, out_spec],
        ),
        compiler_params=pltpu.CompilerParams(
            dimension_semantics=("parallel",),
            vmem_limit_bytes=vmem_limit),
        cost_estimate=cost,
    )(x_mm, w, b, eps)

    return z, mu, log_var


if __name__ == "__main__":
    # Small shapes consistent with the module: x: [B, in_features]
    B, F_in, F_out = 16, 32, 64

    key = jax.random.PRNGKey(0)
    kx, kwm, kbm, kwv, kbv, keps = jax.random.split(key, 6)

    x = jax.random.normal(kx, (B, F_in), dtype=jnp.float32)

    # Deterministic param init (PyTorch nn.Linear default: U(-1/sqrt(in), 1/sqrt(in)))
    bound = 1.0 / (F_in ** 0.5)
    w_mu = jax.random.uniform(kwm, (F_in, F_out), jnp.float32, -bound, bound)
    b_mu = jax.random.uniform(kbm, (1, F_out), jnp.float32, -bound, bound)
    w_lv = jax.random.uniform(kwv, (F_in, F_out), jnp.float32, -bound, bound)
    b_lv = jax.random.uniform(kbv, (1, F_out), jnp.float32, -bound, bound)

    # Plain-JAX f32 reference.
    mu_ref = x @ w_mu + b_mu
    lv_ref = jax.nn.softplus(x @ w_lv + b_lv)
    eps_ref = jax.random.normal(keps, (B, F_out), dtype=jnp.float32)

    # 1) f32 MXU path: tight check against the reference.
    z32, mu32, lv32 = gaussian_unit_sample(
        x, w_mu, b_mu, w_lv, b_lv, keps, matmul_dtype=jnp.float32)
    jax.block_until_ready((z32, mu32, lv32))
    assert z32.shape == (B, F_out) and mu32.shape == (B, F_out) and lv32.shape == (B, F_out)
    assert jnp.allclose(mu32, mu_ref, atol=1e-4, rtol=1e-4)
    assert jnp.allclose(lv32, lv_ref, atol=1e-4, rtol=1e-4)
    assert jnp.allclose(z32, mu_ref + eps_ref, atol=1e-4, rtol=1e-4)

    # 2) default bf16-MXU path (f32 accumulation): looser tolerance on the
    #    matmul results; the reparameterization residual stays (near-)exact.
    z, mu, log_var = gaussian_unit_sample(x, w_mu, b_mu, w_lv, b_lv, keps)
    jax.block_until_ready((z, mu, log_var))
    assert z.shape == (B, F_out) and mu.shape == (B, F_out) and log_var.shape == (B, F_out)
    assert jnp.allclose(mu, mu_ref, atol=3e-2, rtol=3e-2)
    assert jnp.allclose(log_var, lv_ref, atol=3e-2, rtol=3e-2)
    assert jnp.allclose(z - mu, eps_ref, atol=1e-5)
    assert bool(jnp.all(jnp.isfinite(z)))

    print("KERNEL_OK")
</pallas_src>

<mosaic_0001>
module attributes {stable_mosaic.version = 11 : i64} {
  func.func @_gaussian_unit_sample_kernel(%arg0: i32, %arg1: memref<16x32xf32, #tpu.memory_space<vmem>>, %arg2: memref<32x128xf32, #tpu.memory_space<vmem>>, %arg3: memref<1x128xf32, #tpu.memory_space<vmem>>, %arg4: memref<16x64xf32, #tpu.memory_space<vmem>>, %arg5: memref<16x64xf32, #tpu.memory_space<vmem>>, %arg6: memref<16x64xf32, #tpu.memory_space<vmem>>, %arg7: memref<16x64xf32, #tpu.memory_space<vmem>>) attributes {dimension_semantics = [#tpu.dimension_semantics<parallel>], iteration_bounds = array<i64: 1>, scalar_prefetch = 0 : i64, scratch_operands = 0 : i64, tpu.core_type = #tpu.core_type<tc>, window_params = [{transform_indices = @transform_0, window_bounds = array<i64: 16, 32>}, {pipeline_mode = #tpu.pipeline_mode<synchronous>, transform_indices = @transform_1, window_bounds = array<i64: 32, 128>}, {pipeline_mode = #tpu.pipeline_mode<synchronous>, transform_indices = @transform_2, window_bounds = array<i64: 1, 128>}, {transform_indices = @transform_3, window_bounds = array<i64: 16, 64>}, {transform_indices = @transform_4, window_bounds = array<i64: 16, 64>}, {transform_indices = @transform_5, window_bounds = array<i64: 16, 64>}, {transform_indices = @transform_6, window_bounds = array<i64: 16, 64>}]} {
    %c0 = arith.constant 0 : index
    %c0_0 = arith.constant 0 : index
    %0 = vector.load %arg1[%c0, %c0_0] : memref<16x32xf32, #tpu.memory_space<vmem>>, vector<16x32xf32>
    %c0_1 = arith.constant 0 : index
    %c0_2 = arith.constant 0 : index
    %1 = vector.load %arg2[%c0_1, %c0_2] : memref<32x128xf32, #tpu.memory_space<vmem>>, vector<32x128xf32>
    %cst = arith.constant dense<0.000000e+00> : vector<16x128xf32>
    %2 = tpu.matmul %0, %1, %cst {dimension_numbers = #tpu.dot_dimension_numbers<[1], [0], [0], [1], [0, 0, 1, 1], [], []>} : vector<16x32xf32>, vector<32x128xf32>, vector<16x128xf32> -> vector<16x128xf32>
    %c0_3 = arith.constant 0 : index
    %c0_4 = arith.constant 0 : index
    %3 = vector.load %arg3[%c0_3, %c0_4] : memref<1x128xf32, #tpu.memory_space<vmem>>, vector<1x128xf32>
    %4 = vector.broadcast %3 : vector<1x128xf32> to vector<16x128xf32>
    %5 = arith.addf %2, %4 : vector<16x128xf32>
    %6 = vector.extract_strided_slice %5 {offsets = [0, 0], sizes = [16, 64], strides = [1, 1]} : vector<16x128xf32> to vector<16x64xf32>
    %7 = vector.extract_strided_slice %5 {offsets = [0, 64], sizes = [16, 64], strides = [1, 1]} : vector<16x128xf32> to vector<16x64xf32>
    %cst_5 = arith.constant 0.000000e+00 : f32
    %8 = vector.broadcast %cst_5 : f32 to vector<16x64xf32>
    %9 = arith.maximumf %7, %8 : vector<16x64xf32>
    %10 = math.absf %7 : vector<16x64xf32>
    %cst_6 = arith.constant 0.000000e+00 : f32
    %11 = vector.broadcast %cst_6 : f32 to vector<16x64xf32>
    %12 = arith.subf %11, %10 : vector<16x64xf32>
    %13 = math.exp %12 : vector<16x64xf32>
    %14 = math.log1p %13 : vector<16x64xf32>
    %15 = arith.addf %9, %14 : vector<16x64xf32>
    %c0_7 = arith.constant 0 : index
    %c0_8 = arith.constant 0 : index
    %16 = vector.load %arg4[%c0_7, %c0_8] : memref<16x64xf32, #tpu.memory_space<vmem>>, vector<16x64xf32>
    %17 = arith.addf %6, %16 : vector<16x64xf32>
    %c0_9 = arith.constant 0 : index
    %c0_10 = arith.constant 0 : index
    %18 = vector.load %arg5[%c0_9, %c0_10] : memref<16x64xf32, #tpu.memory_space<vmem>>, vector<16x64xf32>
    tpu.vector_store %arg5[%c0_9, %c0_10], %17 {strides = array<i32>} : memref<16x64xf32, #tpu.memory_space<vmem>>, vector<16x64xf32>,
    %c0_11 = arith.constant 0 : index
    %c0_12 = arith.constant 0 : index
    %19 = vector.load %arg6[%c0_11, %c0_12] : memref<16x64xf32, #tpu.memory_space<vmem>>, vector<16x64xf32>
    tpu.vector_store %arg6[%c0_11, %c0_12], %6 {strides = array<i32>} : memref<16x64xf32, #tpu.memory_space<vmem>>, vector<16x64xf32>,
    %c0_13 = arith.constant 0 : index
    %c0_14 = arith.constant 0 : index
    %20 = vector.load %arg7[%c0_13, %c0_14] : memref<16x64xf32, #tpu.memory_space<vmem>>, vector<16x64xf32>
    tpu.vector_store %arg7[%c0_13, %c0_14], %15 {strides = array<i32>} : memref<16x64xf32, #tpu.memory_space<vmem>>, vector<16x64xf32>,
    return
  }
  func.func @transform_0(%arg0: i32) -> (i32, i32) {
    %c0_i32 = arith.constant 0 : i32
    %c0_i32_0 = arith.constant 0 : i32
    return %arg0, %c0_i32 : i32, i32
  }
  func.func @transform_1(%arg0: i32) -> (i32, i32) {
    %c0_i32 = arith.constant 0 : i32
    %c0_i32_0 = arith.constant 0 : i32
    %c0_i32_1 = arith.constant 0 : i32
    return %c0_i32, %c0_i32_0 : i32, i32
  }
  func.func @transform_2(%arg0: i32) -> (i32, i32) {
    %c0_i32 = arith.constant 0 : i32
    %c0_i32_0 = arith.constant 0 : i32
    %c0_i32_1 = arith.constant 0 : i32
    return %c0_i32, %c0_i32_0 : i32, i32
  }
  func.func @transform_3(%arg0: i32) -> (i32, i32) {
    %c0_i32 = arith.constant 0 : i32
    %c0_i32_0 = arith.constant 0 : i32
    return %arg0, %c0_i32 : i32, i32
  }
  func.func @transform_4(%arg0: i32) -> (i32, i32) {
    %c0_i32 = arith.constant 0 : i32
    %c0_i32_0 = arith.constant 0 : i32
    return %arg0, %c0_i32 : i32, i32
  }
  func.func @transform_5(%arg0: i32) -> (i32, i32) {
    %c0_i32 = arith.constant 0 : i32
    %c0_i32_0 = arith.constant 0 : i32
    return %arg0, %c0_i32 : i32, i32
  }
  func.func @transform_6(%arg0: i32) -> (i32, i32) {
    %c0_i32 = arith.constant 0 : i32
    %c0_i32_0 = arith.constant 0 : i32
    return %arg0, %c0_i32 : i32, i32
  }
}

</mosaic_0001>

<llo_original>
// kernel: tpu_custom_call.1
$region0: #{tpu_custom_call.1}
  #allocation0 [shape = 'u32[]', space=smem, size = 0x4, offset = 0x4, fixed_abs, tag = 'smem constant byte address 0x4 - core index']
  #allocation1 [shape = 'u32[144,128]{1,0:T(1,128)}', space=vmem, size = 0x12000, scoped, tag = 'internal scratch']
  %s0 = inlined_call_operand.hbm [shape: f32[16,32], index: 0, kind: input, shape index: {}]
  %s1 = inlined_call_operand.hbm [shape: f32[32,128], index: 1, kind: input, shape index: {}]
  %s2 = inlined_call_operand.vmem [shape: f32[1,128], index: 2, kind: input, shape index: {}]
  %s3 = inlined_call_operand.hbm [shape: f32[16,64], index: 3, kind: input, shape index: {}]
  %s4 = inlined_call_operand.hbm [shape: f32[16,64], index: 4, kind: output, shape index: {0}]
  %s5 = inlined_call_operand.hbm [shape: f32[16,64], index: 5, kind: output, shape index: {1}]
  %s6 = inlined_call_operand.hbm [shape: f32[16,64], index: 6, kind: output, shape index: {2}]
  %7 = xla_tuple %s4, %s5, %s6
  %s8 = sld [smem:[#allocation0]]
  $region54: #{tpu_custom_call.1} parent=0
    _
  %s10 = ssub.s32 1, %s8
  %s11 = scalar_select 0, %s10, %s8
  $region1: #{tpu_custom_call.1} parent=0
    #allocation2 [shape = 'u8[8192]{0}', space=vmem, size = 0x2000, scoped, tag = 'input window, operand 0, single buffered']
    #allocation3 [shape = 's32[1]{0}', space=sflag, size = 0x4, scoped, tag = 'scoped memory for tpu_custom_call.1']
    #allocation4 [shape = 's32[1]{0}', space=sflag, size = 0x4, scoped, tag = 'scoped memory for tpu_custom_call.1']
    #allocation5 [shape = 'u8[16384]{0}', space=vmem, size = 0x4000, scoped, tag = 'input window, operand 1, single buffered']
    #allocation6 [shape = 's32[1]{0}', space=sflag, size = 0x4, scoped, tag = 'scoped memory for tpu_custom_call.1']
    #allocation7 [shape = 'u8[8192]{0}', space=vmem, size = 0x2000, scoped, tag = 'input window, operand 3, single buffered']
    #allocation8 [shape = 'u8[8192]{0}', space=vmem, size = 0x2000, scoped, tag = 'output window, operand 0, single buffered']
    #allocation9 [shape = 'u8[8192]{0}', space=vmem, size = 0x2000, scoped, tag = 'output window, operand 1, single buffered']
    #allocation10 [shape = 's32[1]{0}', space=sflag, size = 0x4, scoped, tag = 'scoped memory for tpu_custom_call.1']
    #allocation11 [shape = 'u8[8192]{0}', space=vmem, size = 0x2000, scoped, tag = 'output window, operand 2, single buffered']
    %12 = vsyncpa [#allocation3], 0
    %13 = vsyncpa [#allocation6], 0
    %14 = vsyncpa [#allocation4], 0
    %15 = vsyncpa [#allocation10], 0
    // Predicated region
    $region2: #{tpu_custom_call.1} parent=1 // pred_check
      _
    $region3: #{tpu_custom_call.1} parent=1 // pred_check_branch
      %17 = sbr.rel (0) target = $region5
    $region4: #{tpu_custom_call.1} parent=1 // pred_region
      %s19 = ssub.s32 256, 256
      %20 = vsyncadd [#allocation3], %s19
      %s21 = sshll.u32 [#allocation2], 4
      %s22 = int_to_ptr.vmem [resolvable:$true] %s21
      %27 = dma.hbm_to_vmem [thread:$0]  %s0, 256, %s22, [#allocation3], 128, 128, 8
    $region5: #{tpu_custom_call.1} parent=1 // pred_fallthru
      _
    // Predicated region
    $region6: #{tpu_custom_call.1} parent=1 // pred_check
      _
    $region7: #{tpu_custom_call.1} parent=1 // pred_check_branch
      %29 = sbr.rel (0) target = $region9
    $region8: #{tpu_custom_call.1} parent=1 // pred_region
      %s31 = ssub.s32 512, 512
      %32 = vsyncadd [#allocation6], %s31
      %s33 = sshll.u32 [#allocation5], 4
      %s34 = int_to_ptr.vmem [resolvable:$true] %s33
      %39 = dma.hbm_to_vmem [thread:$0]  %s1, 512, %s34, [#allocation6], 128, 128, 8
    $region9: #{tpu_custom_call.1} parent=1 // pred_fallthru
      _
    // Predicated region
    $region10: #{tpu_custom_call.1} parent=1 // pred_check
      _
    $region11: #{tpu_custom_call.1} parent=1 // pred_check_branch
      %41 = sbr.rel (0) target = $region13
    $region12: #{tpu_custom_call.1} parent=1 // pred_region
      _
    $region13: #{tpu_custom_call.1} parent=1 // pred_fallthru
      _
    // Predicated region
    $region14: #{tpu_custom_call.1} parent=1 // pred_check
      _
    $region15: #{tpu_custom_call.1} parent=1 // pred_check_branch
      %43 = sbr.rel (0) target = $region17
    $region16: #{tpu_custom_call.1} parent=1 // pred_region
      %s45 = ssub.s32 256, 256
      %46 = vsyncadd [#allocation6], %s45
      %s47 = sshll.u32 [#allocation7], 4
      %s48 = int_to_ptr.vmem [resolvable:$true] %s47
      %53 = dma.hbm_to_vmem [thread:$0]  %s3, 256, %s48, [#allocation6], 128, 128, 8
    $region17: #{tpu_custom_call.1} parent=1 // pred_fallthru
      _
    // Predicated region
    $region18: #{tpu_custom_call.1} parent=1 // pred_check
      _
    $region19: #{tpu_custom_call.1} parent=1 // pred_check_branch
      %55 = sbr.rel (0) target = $region21
    $region20: #{tpu_custom_call.1} parent=1 // pred_region
      %56 = dma.done [#allocation3], 256
    $region21: #{tpu_custom_call.1} parent=1 // pred_fallthru
      _
    // Predicated region
    $region22: #{tpu_custom_call.1} parent=1 // pred_check
      _
    $region23: #{tpu_custom_call.1} parent=1 // pred_check_branch
      %58 = sbr.rel (0) target = $region25
    $region24: #{tpu_custom_call.1} parent=1 // pred_region
      %59 = dma.done [#allocation6], 512
    $region25: #{tpu_custom_call.1} parent=1 // pred_fallthru
      _
    // Predicated region
    $region26: #{tpu_custom_call.1} parent=1 // pred_check
      _
    $region27: #{tpu_custom_call.1} parent=1 // pred_check_branch
      %61 = sbr.rel (0) target = $region29
    $region28: #{tpu_custom_call.1} parent=1 // pred_region
      %62 = dma.done [#allocation6], 256
    $region29: #{tpu_custom_call.1} parent=1 // pred_fallthru
      _
    %v63 = vld [vmem:[#allocation2] sm:$0xff]
    %v64 = vld [vmem:[#allocation2 + $0x8] sm:$0xff]
    %v65 = vld [vmem:[#allocation5] sm:$0xff]
    %v66 = vld [vmem:[#allocation5 + $0x8] sm:$0xff]
    %v67 = vld [vmem:[#allocation5 + $0x10] sm:$0xff]
    %v68 = vld [vmem:[#allocation5 + $0x18] sm:$0xff]
    %v69 = vld [vmem:[%s2] sm:$0x1]
    %v71 = vlaneseq
    %v72 = vshrl.u32 %v71, 7
    %v73 = vsub.s32 0, %v72
    %v74 = vrot.slane %v69, %v73
    %vm76 = vcmask 261120
    %v78 = vsel %vm76, %v63, 0
    %v81 = vsel %vm76, %v64, 0
    %83 = vmatprep.subr.mxu0 0.0
    %84 = vmatpush1.msra.mxu0 %v65
    %85 = vmatprep.subr.mxu0 0.0
    %86 = vmatpush1.msra.mxu0 %v66
    %87 = vmatprep.subr.mxu0 0.0
    %88 = vmatpush1.msra.mxu0 %v67
    %89 = vmatprep.subr.mxu0 0.0
    %90 = vmatpush1.msra.mxu0 %v68
    %91 = vmatprep.subr.mxu0 0.0
    %92 = vmatpush1.msra.mxu0 0.0
    %93 = vmatprep.subr.mxu0 0.0
    %94 = vmatpush1.msra.mxu0 0.0
    %95 = vmatprep.subr.mxu0 0.0
    %96 = vmatpush1.msra.mxu0 0.0
    %97 = vmatprep.subr.mxu0 0.0
    %98 = vmatpush1.msra.mxu0 0.0
    %99 = vmatprep.subr.mxu0 0.0
    %100 = vmatpush1.msra.mxu0 0.0
    %101 = vmatprep.subr.mxu0 0.0
    %102 = vmatpush1.msra.mxu0 0.0
    %103 = vmatprep.subr.mxu0 0.0
    %104 = vmatpush1.msra.mxu0 0.0
    %105 = vmatprep.subr.mxu0 0.0
    %106 = vmatpush1.msra.mxu0 0.0
    %107 = vmatprep.subr.mxu0 0.0
    %108 = vmatpush1.msra.mxu0 0.0
    %109 = vmatprep.subr.mxu0 0.0
    %110 = vmatpush1.msra.mxu0 0.0
    %111 = vmatprep.subr.mxu0 0.0
    %112 = vmatpush1.msra.mxu0 0.0
    %113 = vmatprep.subr.mxu0 0.0
    %114 = vmatpush1.msra.mxu0 0.0
    %115 = vmatprep.subr.mxu0 0.0
    %116 = vmatpush1.msra.mxu0 0.0
    %117 = vmatprep.subr.mxu0 0.0
    %118 = vmatpush1.msra.mxu0 0.0
    %119 = vmatprep.subr.mxu0 0.0
    %120 = vmatpush1.msra.mxu0 0.0
    %121 = vmatprep.subr.mxu0 0.0
    %122 = vmatpush1.msra.mxu0 0.0
    %123 = vmatprep.subr.mxu0 0.0
    %124 = vmatpush1.msra.mxu0 0.0
    %125 = vmatprep.subr.mxu0 0.0
    %126 = vmatpush1.msra.mxu0 0.0
    %127 = vmatprep.subr.mxu0 0.0
    %128 = vmatpush1.msra.mxu0 0.0
    %129 = vmatprep.subr.mxu0 0.0
    %130 = vmatpush1.msra.mxu0 0.0
    %131 = vmatprep.subr.mxu0 0.0
    %132 = vmatpush1.msra.mxu0 0.0
    %133 = vmatprep.subr.mxu0 0.0
    %134 = vmatpush1.msra.mxu0 0.0
    %135 = vmatprep.subr.mxu0 0.0
    %136 = vmatpush1.msra.mxu0 0.0
    %137 = vmatprep.subr.mxu0 0.0
    %138 = vmatpush1.msra.mxu0 0.0
    %139 = vmatprep.subr.mxu0 0.0
    %140 = vmatpush1.msra.mxu0 0.0
    %141 = vmatprep.subr.mxu0 0.0
    %142 = vmatpush1.msra.mxu0 0.0
    %143 = vmatprep.subr.mxu0 0.0
    %144 = vmatpush1.msra.mxu0 0.0
    %145 = vmatprep.subr.mxu0 0.0
    %146 = vmatpush1.msra.mxu0 0.0
    %147 = vmatprep.mubr.f32.mxu0 0.0
    %148 = vmatmul.mubr.f32.gmra.mrb[0].mxu0 %v78
    %v149 = vpop.f32.mrb[0].mxu0
    %v150 = vadd.f32 %v74, %v149
    %v151 = vpop.f32.mrb[0].mxu0
    %152 = vmatprep.mubr.f32.mxu0 0.0
    %153 = vmatmul.mubr.f32.gmra.mrb[0].mxu0 %v81
    %v154 = vpop.f32.mrb[0].mxu0
    %v155 = vadd.f32 %v74, %v154
    %v156 = vpop.f32.mrb[0].mxu0
    %157 = vdwg.mxu0
    %v158 = vmax.f32 %v150, 0.0
    %v159 = vmax.f32 %v155, 0.0
    %v160 = vand.u32 2147483647, %v150
    %v161 = vand.u32 2147483647, %v155
    %v162 = vsub.f32 0.0, %v160
    %v163 = vsub.f32 0.0, %v161
    %v164 = vmul.f32 %v162, 1.442695
    %v165 = vpow.pop %v164
    %v166 = vmul.f32 %v163, 1.442695
    %v167 = vpow.pop %v166
    %v168 = vadd.f32 %v165, 1.0
    %v169 = vlog2.pop %v168
    %v170 = vmul.f32 %v169, 0.6931472
    %v171 = vmul.f32 -0.5, %v165
    %v172 = vadd.f32 %v171, 1.0
    %v173 = vmul.f32 %v172, %v165
    %v174 = vand.u32 2147483647, %v165
    %vm175 = vcmp.lt.f32.partialorder %v174, 0.0004427343
    %v176 = vsel %vm175, %v173, %v170
    %v177 = vadd.f32 %v167, 1.0
    %v178 = vlog2.pop %v177
    %v179 = vmul.f32 %v178, 0.6931472
    %v180 = vmul.f32 -0.5, %v167
    %v181 = vadd.f32 %v180, 1.0
    %v182 = vmul.f32 %v181, %v167
    %v183 = vand.u32 2147483647, %v167
    %vm184 = vcmp.lt.f32.partialorder %v183, 0.0004427343
    %v185 = vsel %vm184, %v182, %v179
    %v186 = vadd.f32 %v158, %v176
    %v187 = vadd.f32 %v159, %v185
    %v188 = vld [vmem:[#allocation7] sm:$0xff]
    %v189 = vld [vmem:[#allocation7 + $0x8] sm:$0xff]
    %v190 = vadd.f32 %v150, %v188
    %v191 = vadd.f32 %v155, %v189
    %vm192 = vcmask 523264
    %193 = vst.msk [vmem:[#allocation8] sm:$0xff] %vm192, %v190
    %194 = vst.msk [vmem:[#allocation8 + $0x8] sm:$0xff] %vm192, %v191
    %195 = vst.msk [vmem:[#allocation9] sm:$0xff] %vm192, %v150
    %196 = vst.msk [vmem:[#allocation9 + $0x8] sm:$0xff] %vm192, %v155
    %199 = vrot.lane.b32.xlu0 %v186, 64
    %v200 = vpop.permute.xlu0 %199
    %201 = vrot.lane.b32.xlu0 %v187, 64
    %v202 = vpop.permute.xlu0 %201
    %205 = vst.msk [vmem:[#allocation11] sm:$0xff] %vm192, %v200
    %206 = vst.msk [vmem:[#allocation11 + $0x8] sm:$0xff] %vm192, %v202
    // Predicated region
    $region30: #{tpu_custom_call.1} parent=1 // pred_check
      _
    $region31: #{tpu_custom_call.1} parent=1 // pred_check_branch
      %208 = sbr.rel (0) target = $region33
    $region32: #{tpu_custom_call.1} parent=1 // pred_region
      %s210 = ssub.s32 256, 256
      %211 = vsyncadd [#allocation4], %s210
      %s212 = sshll.u32 [#allocation8], 4
      %s213 = int_to_ptr.vmem [resolvable:$true] %s212
      %218 = dma.vmem_to_hbm [thread:$0]  %s213, 256, %s4, [#allocation4], 128, 128, 8
    $region33: #{tpu_custom_call.1} parent=1 // pred_fallthru
      _
    // Predicated region
    $region34: #{tpu_custom_call.1} parent=1 // pred_check
      _
    $region35: #{tpu_custom_call.1} parent=1 // pred_check_branch
      %220 = sbr.rel (0) target = $region37
    $region36: #{tpu_custom_call.1} parent=1 // pred_region
      %s222 = ssub.s32 256, 256
      %223 = vsyncadd [#allocation10], %s222
      %s224 = sshll.u32 [#allocation9], 4
      %s225 = int_to_ptr.vmem [resolvable:$true] %s224
      %230 = dma.vmem_to_hbm [thread:$0]  %s225, 256, %s5, [#allocation10], 128, 128, 8
    $region37: #{tpu_custom_call.1} parent=1 // pred_fallthru
      _
    // Predicated region
    $region38: #{tpu_custom_call.1} parent=1 // pred_check
      _
    $region39: #{tpu_custom_call.1} parent=1 // pred_check_branch
      %232 = sbr.rel (0) target = $region41
    $region40: #{tpu_custom_call.1} parent=1 // pred_region
      %s234 = ssub.s32 256, 256
      %235 = vsyncadd [#allocation10], %s234
      %s236 = sshll.u32 [#allocation11], 4
      %s237 = int_to_ptr.vmem [resolvable:$true] %s236
      %242 = dma.vmem_to_hbm [thread:$0]  %s237, 256, %s6, [#allocation10], 128, 128, 8
    $region41: #{tpu_custom_call.1} parent=1 // pred_fallthru
      _
    // Predicated region
    $region42: #{tpu_custom_call.1} parent=1 // pred_check
      _
    $region43: #{tpu_custom_call.1} parent=1 // pred_check_branch
      %244 = sbr.rel (0) target = $region45
    $region44: #{tpu_custom_call.1} parent=1 // pred_region
      %245 = dma.done [#allocation4], 256
    $region45: #{tpu_custom_call.1} parent=1 // pred_fallthru
      _
    // Predicated region
    $region46: #{tpu_custom_call.1} parent=1 // pred_check
      _
    $region47: #{tpu_custom_call.1} parent=1 // pred_check_branch
      %247 = sbr.rel (0) target = $region49
    $region48: #{tpu_custom_call.1} parent=1 // pred_region
      %248 = dma.done [#allocation10], 256
    $region49: #{tpu_custom_call.1} parent=1 // pred_fallthru
      _
    // Predicated region
    $region50: #{tpu_custom_call.1} parent=1 // pred_check
      _
    $region51: #{tpu_custom_call.1} parent=1 // pred_check_branch
      %250 = sbr.rel (0) target = $region53
    $region52: #{tpu_custom_call.1} parent=1 // pred_region
      %251 = dma.done [#allocation10], 256
    $region53: #{tpu_custom_call.1} parent=1 // pred_fallthru
      _
    %252 = vsyncpa [#allocation3], 1
    %253 = vsyncpa [#allocation6], 1
    %254 = vsyncpa [#allocation4], 1
    %255 = vsyncpa [#allocation10], 1

</llo_original>
